<compile_context>
chip_gen: v6e
topology: v6e:2x2x1
jax: 0.10.0
libtpu: 0.0.40
codegen_flags: <defaults>
</compile_context>

<pallas_src>
import jax
import jax.numpy as jnp
from jax.experimental import pallas as pl
from jax.experimental.pallas import tpu as pltpu


def _pos_embed_sine_kernel(x_ref, y_ref, xe_ref, invh_ref, ph_ref, o_ref,
                           pos_ref):
    # x_ref / o_ref  : (1, C, thw)   input tile / output tile
    # y_ref / xe_ref : (1, thw)      flattened y / x position tables (this tile)
    # invh_ref       : (half, 1)     1 / dim_t   (per half-channel)
    # ph_ref         : (half, 1)     0 or pi/2   (sin vs cos channels)
    # pos_ref        : (C, thw) f32  VMEM scratch, persists across batch steps
    half = invh_ref.shape[0]

    @pl.when(pl.program_id(1) == 0)
    def _():
        # pos is batch-invariant: compute once per HW tile, reuse for b > 0.
        arg_y = y_ref[...] * invh_ref[...] + ph_ref[...]    # (half, thw)
        arg_x = xe_ref[...] * invh_ref[...] + ph_ref[...]   # (half, thw)
        pos_ref[:half, :] = jnp.sin(arg_y)                  # y-half channels
        pos_ref[half:, :] = jnp.sin(arg_x)                  # x-half channels

    o_ref[...] = (pos_ref[...][None, :, :]
                  + x_ref[...].astype(jnp.float32)).astype(o_ref.dtype)


def _round_up(v, m):
    return (v + m - 1) // m * m


def _pick_hw_tile(hw, c, batch, target_plane_bytes=2 << 20):
    """Lane-dense (multiple-of-128) tile width for the flattened H*W axis.

    Budgets ~target_plane_bytes for the f32 (C, thw) plane (the kernel keeps
    f32 intermediates of that size), and guarantees >= 2 grid steps on the
    parallel tile axis when batch == 1 so both v7x TensorCores get work.
    """
    max_lanes = max(128, (target_plane_bytes // max(c * 4, 1)) // 128 * 128)
    thw = min(_round_up(hw, 128), max_lanes)
    if batch == 1 and hw > 128:
        thw = min(thw, max(128, _round_up(pl.cdiv(hw, 2), 128)))
    return thw


def position_embedding_sine(x, num_pos_feats=64, temperature=10000,
                            preserve_input_dtype=False):
    """x: (B, 2*num_pos_feats, H, W) -> pos + x, same shape."""
    B, C, H, W = x.shape
    assert C == 2 * num_pos_feats, "channel dim must equal 2 * num_pos_feats"
    half = num_pos_feats
    HW = H * W
    out_dtype = (x.dtype if preserve_input_dtype
                 else jnp.result_type(x.dtype, jnp.float32))

    thw = _pick_hw_tile(HW, C, B)
    HW_pad = _round_up(HW, thw)
    n_tiles = HW_pad // thw

    # ---- tiny precomputed tables (host/XLA side, a few KiB) -----------------
    f = jnp.arange(half, dtype=jnp.float32)
    dim_t = jnp.asarray(float(temperature), jnp.float32) ** (
        2.0 * jnp.floor(f / 2.0) / float(half))
    inv_half = (1.0 / dim_t).reshape(half, 1)                        # (half,1)
    phase_half = jnp.where(jnp.arange(half) % 2 == 0, 0.0,
                           jnp.pi / 2.0).astype(jnp.float32).reshape(half, 1)

    p = jnp.arange(HW_pad, dtype=jnp.int32)
    y_flat = ((p // W) + 1).astype(jnp.float32).reshape(1, HW_pad)   # rows 1..H
    x_flat = ((p % W) + 1).astype(jnp.float32).reshape(1, HW_pad)    # cols 1..W

    x2 = x.reshape(B, C, HW)                                         # free view
    if HW_pad != HW:
        x2 = jnp.pad(x2, ((0, 0), (0, 0), (0, HW_pad - HW)))

    grid = (n_tiles, B)

    out = pl.pallas_call(
        _pos_embed_sine_kernel,
        out_shape=jax.ShapeDtypeStruct((B, C, HW_pad), out_dtype),
        grid=grid,
        in_specs=[
            pl.BlockSpec((1, C, thw), lambda w, b: (b, 0, w)),       # x
            pl.BlockSpec((1, thw), lambda w, b: (0, w)),             # y_flat
            pl.BlockSpec((1, thw), lambda w, b: (0, w)),             # x_flat
            pl.BlockSpec((half, 1), lambda w, b: (0, 0)),            # 1/dim_t
            pl.BlockSpec((half, 1), lambda w, b: (0, 0)),            # phase
        ],
        out_specs=pl.BlockSpec((1, C, thw), lambda w, b: (b, 0, w)),
        scratch_shapes=[pltpu.VMEM((C, thw), jnp.float32)],          # pos cache
        compiler_params=pltpu.CompilerParams(
            dimension_semantics=("parallel", "arbitrary"),
            vmem_limit_bytes=32 * 1024 * 1024),
    )(x2, y_flat, x_flat, inv_half, phase_half)

    if HW_pad != HW:
        out = out[:, :, :HW]
    return out.reshape(B, C, H, W)


def _reference(x, num_pos_feats, temperature):
    """Pure-JAX transcription of the PyTorch forward (for verification)."""
    B, C, H, W = x.shape
    y_embed, x_embed = jnp.meshgrid(
        jnp.linspace(1.0, H, H), jnp.linspace(1.0, W, W), indexing="ij")
    dim_t = jnp.arange(num_pos_feats, dtype=jnp.float32)
    dim_t = temperature ** (2.0 * jnp.floor(dim_t / 2.0) / num_pos_feats)
    pos_x = x_embed[None, :, :, None] / dim_t
    pos_y = y_embed[None, :, :, None] / dim_t
    pos_x = jnp.stack(
        (jnp.sin(pos_x[:, :, :, 0::2]), jnp.cos(pos_x[:, :, :, 1::2])),
        axis=4).reshape(1, H, W, num_pos_feats)
    pos_y = jnp.stack(
        (jnp.sin(pos_y[:, :, :, 0::2]), jnp.cos(pos_y[:, :, :, 1::2])),
        axis=4).reshape(1, H, W, num_pos_feats)
    pos = jnp.concatenate((pos_y, pos_x), axis=3).transpose(0, 3, 1, 2)
    return pos + x


if __name__ == "__main__":
    num_pos_feats = 2
    temperature = 10000

    # Primary check: B=2, C=4, 16x16 (H*W = 256 is a 128-multiple: dense path).
    x = jax.random.normal(jax.random.PRNGKey(0),
                          (2, 2 * num_pos_feats, 16, 16), jnp.float32)
    out = jax.block_until_ready(
        position_embedding_sine(x, num_pos_feats, temperature))
    ref = _reference(x, num_pos_feats, temperature)
    assert out.shape == ref.shape and out.dtype == ref.dtype
    assert jnp.allclose(out, ref, atol=1e-4, rtol=1e-4), "mismatch (16x16)"

    # Secondary check: non-128-multiple spatial size exercises the padding path.
    x_odd = jax.random.normal(jax.random.PRNGKey(1),
                              (2, 2 * num_pos_feats, 5, 6), jnp.float32)
    out_odd = jax.block_until_ready(
        position_embedding_sine(x_odd, num_pos_feats, temperature))
    ref_odd = _reference(x_odd, num_pos_feats, temperature)
    assert jnp.allclose(out_odd, ref_odd, atol=1e-4, rtol=1e-4), "mismatch (5x6)"

    print("KERNEL_OK")
</pallas_src>

<mosaic_0001>
module attributes {stable_mosaic.version = 11 : i64} {
  func.func @_pos_embed_sine_kernel(%arg0: i32, %arg1: i32, %arg2: memref<1x4x256xf32, #tpu.memory_space<vmem>>, %arg3: memref<1x256xf32, #tpu.memory_space<vmem>>, %arg4: memref<1x256xf32, #tpu.memory_space<vmem>>, %arg5: memref<2x1xf32, #tpu.memory_space<vmem>>, %arg6: memref<2x1xf32, #tpu.memory_space<vmem>>, %arg7: memref<1x4x256xf32, #tpu.memory_space<vmem>>, %arg8: memref<4x256xf32, #tpu.memory_space<vmem>>) attributes {dimension_semantics = [#tpu.dimension_semantics<parallel>, #tpu.dimension_semantics<arbitrary>], iteration_bounds = array<i64: 1, 2>, scalar_prefetch = 0 : i64, scratch_operands = 1 : i64, tpu.core_type = #tpu.core_type<tc>, window_params = [{transform_indices = @transform_0, window_bounds = array<i64: 1, 4, 256>}, {transform_indices = @transform_1, window_bounds = array<i64: 1, 256>}, {transform_indices = @transform_2, window_bounds = array<i64: 1, 256>}, {pipeline_mode = #tpu.pipeline_mode<synchronous>, transform_indices = @transform_3, window_bounds = array<i64: 2, 1>}, {pipeline_mode = #tpu.pipeline_mode<synchronous>, transform_indices = @transform_4, window_bounds = array<i64: 2, 1>}, {transform_indices = @transform_5, window_bounds = array<i64: 1, 4, 256>}]} {
    %c0_i32 = arith.constant 0 : i32
    %0 = arith.cmpi eq, %arg1, %c0_i32 : i32
    %1 = arith.extui %0 : i1 to i32
    %c0_i32_0 = arith.constant 0 : i32
    %2 = arith.cmpi ne, %1, %c0_i32_0 : i32
    scf.if %2 {
      %c0_8 = arith.constant 0 : index
      %c0_9 = arith.constant 0 : index
      %8 = vector.load %arg3[%c0_8, %c0_9] : memref<1x256xf32, #tpu.memory_space<vmem>>, vector<1x256xf32>
      %c0_10 = arith.constant 0 : index
      %c0_11 = arith.constant 0 : index
      %9 = vector.load %arg5[%c0_10, %c0_11] : memref<2x1xf32, #tpu.memory_space<vmem>>, vector<2x1xf32>
      %10 = vector.broadcast %8 : vector<1x256xf32> to vector<2x256xf32>
      %11 = vector.broadcast %9 : vector<2x1xf32> to vector<2x256xf32>
      %12 = arith.mulf %10, %11 : vector<2x256xf32>
      %c0_12 = arith.constant 0 : index
      %c0_13 = arith.constant 0 : index
      %13 = vector.load %arg6[%c0_12, %c0_13] : memref<2x1xf32, #tpu.memory_space<vmem>>, vector<2x1xf32>
      %14 = vector.broadcast %13 : vector<2x1xf32> to vector<2x256xf32>
      %15 = arith.addf %12, %14 : vector<2x256xf32>
      %c0_14 = arith.constant 0 : index
      %c0_15 = arith.constant 0 : index
      %16 = vector.load %arg4[%c0_14, %c0_15] : memref<1x256xf32, #tpu.memory_space<vmem>>, vector<1x256xf32>
      %c0_16 = arith.constant 0 : index
      %c0_17 = arith.constant 0 : index
      %17 = vector.load %arg5[%c0_16, %c0_17] : memref<2x1xf32, #tpu.memory_space<vmem>>, vector<2x1xf32>
      %18 = vector.broadcast %16 : vector<1x256xf32> to vector<2x256xf32>
      %19 = vector.broadcast %17 : vector<2x1xf32> to vector<2x256xf32>
      %20 = arith.mulf %18, %19 : vector<2x256xf32>
      %c0_18 = arith.constant 0 : index
      %c0_19 = arith.constant 0 : index
      %21 = vector.load %arg6[%c0_18, %c0_19] : memref<2x1xf32, #tpu.memory_space<vmem>>, vector<2x1xf32>
      %22 = vector.broadcast %21 : vector<2x1xf32> to vector<2x256xf32>
      %23 = arith.addf %20, %22 : vector<2x256xf32>
      %24 = math.sin %15 : vector<2x256xf32>
      %c0_20 = arith.constant 0 : index
      %c0_21 = arith.constant 0 : index
      %25 = vector.load %arg8[%c0_20, %c0_21] : memref<4x256xf32, #tpu.memory_space<vmem>>, vector<2x256xf32>
      tpu.vector_store %arg8[%c0_20, %c0_21], %24 {strides = array<i32>} : memref<4x256xf32, #tpu.memory_space<vmem>>, vector<2x256xf32>,
      %26 = math.sin %23 : vector<2x256xf32>
      %c2 = arith.constant 2 : index
      %c0_22 = arith.constant 0 : index
      %27 = vector.load %arg8[%c2, %c0_22] : memref<4x256xf32, #tpu.memory_space<vmem>>, vector<2x256xf32>
      tpu.vector_store %arg8[%c2, %c0_22], %26 {strides = array<i32>} : memref<4x256xf32, #tpu.memory_space<vmem>>, vector<2x256xf32>,
    } else {
    }
    %c0 = arith.constant 0 : index
    %c0_1 = arith.constant 0 : index
    %3 = vector.load %arg8[%c0, %c0_1] : memref<4x256xf32, #tpu.memory_space<vmem>>, vector<4x256xf32>
    %4 = vector.shape_cast %3 : vector<4x256xf32> to vector<1x4x256xf32>
    %c0_2 = arith.constant 0 : index
    %c0_3 = arith.constant 0 : index
    %c0_4 = arith.constant 0 : index
    %5 = vector.load %arg2[%c0_2, %c0_3, %c0_4] : memref<1x4x256xf32, #tpu.memory_space<vmem>>, vector<1x4x256xf32>
    %6 = arith.addf %4, %5 : vector<1x4x256xf32>
    %c0_5 = arith.constant 0 : index
    %c0_6 = arith.constant 0 : index
    %c0_7 = arith.constant 0 : index
    %7 = vector.load %arg7[%c0_5, %c0_6, %c0_7] : memref<1x4x256xf32, #tpu.memory_space<vmem>>, vector<1x4x256xf32>
    tpu.vector_store %arg7[%c0_5, %c0_6, %c0_7], %6 {strides = array<i32>} : memref<1x4x256xf32, #tpu.memory_space<vmem>>, vector<1x4x256xf32>,
    return
  }
  func.func @transform_0(%arg0: i32, %arg1: i32) -> (i32, i32, i32) {
    %c0_i32 = arith.constant 0 : i32
    %c0_i32_0 = arith.constant 0 : i32
    return %arg1, %c0_i32, %arg0 : i32, i32, i32
  }
  func.func @transform_1(%arg0: i32, %arg1: i32) -> (i32, i32) {
    %c0_i32 = arith.constant 0 : i32
    %c0_i32_0 = arith.constant 0 : i32
    return %c0_i32, %arg0 : i32, i32
  }
  func.func @transform_2(%arg0: i32, %arg1: i32) -> (i32, i32) {
    %c0_i32 = arith.constant 0 : i32
    %c0_i32_0 = arith.constant 0 : i32
    return %c0_i32, %arg0 : i32, i32
  }
  func.func @transform_3(%arg0: i32, %arg1: i32) -> (i32, i32) {
    %c0_i32 = arith.constant 0 : i32
    %c0_i32_0 = arith.constant 0 : i32
    %c0_i32_1 = arith.constant 0 : i32
    return %c0_i32, %c0_i32_0 : i32, i32
  }
  func.func @transform_4(%arg0: i32, %arg1: i32) -> (i32, i32) {
    %c0_i32 = arith.constant 0 : i32
    %c0_i32_0 = arith.constant 0 : i32
    %c0_i32_1 = arith.constant 0 : i32
    return %c0_i32, %c0_i32_0 : i32, i32
  }
  func.func @transform_5(%arg0: i32, %arg1: i32) -> (i32, i32, i32) {
    %c0_i32 = arith.constant 0 : i32
    %c0_i32_0 = arith.constant 0 : i32
    return %arg1, %c0_i32, %arg0 : i32, i32, i32
  }
}

</mosaic_0001>

<llo_original>
// kernel: tpu_custom_call.1
$region0: #{tpu_custom_call.1}
  #allocation0 [shape = 'u32[]', space=smem, size = 0x4, offset = 0x4, fixed_abs, tag = 'smem constant byte address 0x4 - core index']
  #allocation1 [shape = 'u32[144,128]{1,0:T(1,128)}', space=vmem, size = 0x12000, scoped, tag = 'internal scratch']
  #allocation2 [shape = 'f32[4,256]{1,0:T(4,128)}', space=vmem, size = 0x1000, scoped, tag = 'scratch operand']
  %s0 = inlined_call_operand.hbm [shape: f32[2,4,256], index: 0, kind: input, shape index: {}]
  %s1 = inlined_call_operand.vmem [shape: f32[1,256], index: 1, kind: input, shape index: {}]
  %s2 = inlined_call_operand.vmem [shape: f32[1,256], index: 2, kind: input, shape index: {}]
  %s3 = inlined_call_operand.vmem [shape: f32[2,1], index: 3, kind: input, shape index: {}]
  %s4 = inlined_call_operand.vmem [shape: f32[2,1], index: 4, kind: input, shape index: {}]
  %s5 = inlined_call_operand.hbm [shape: f32[2,4,256], index: 5, kind: output, shape index: {}]
  %s6 = sld [smem:[#allocation0]]
  $region61: #{tpu_custom_call.1} parent=0
    _
  %s8 = ssub.s32 1, %s6
  %s9 = scalar_select 0, %s8, %s6
  $region1: #{tpu_custom_call.1} parent=0
    #allocation3 [shape = 'u8[8192]{0}', space=vmem, size = 0x2000, scoped, tag = 'input window, operand 0']
    #allocation4 [shape = 's32[2]{0}', space=sflag, size = 0x8, scoped, tag = 'scoped memory for tpu_custom_call.1']
    #allocation5 [shape = 's32[2]{0}', space=sflag, size = 0x8, scoped, tag = 'scoped memory for tpu_custom_call.1']
    #allocation6 [shape = 'u8[8192]{0}', space=vmem, size = 0x2000, scoped, tag = 'output window, operand 0']
    %10 = vsyncpa [#allocation4], 0
    %s11 = scalar_lea.sflag [#allocation4], 1
    %12 = vsyncpa %s11, 0
    %13 = vsyncpa [#allocation5], 0
    %s14 = scalar_lea.sflag [#allocation5], 1
    %15 = vsyncpa %s14, 0
    loop: start=0, step=1, limit=4
    $region2: #{tpu_custom_call.1} parent=1 // loop_pre_header
      _
    $region3: #{tpu_custom_call.1} parent=1 // loop_header
      %s17 = sphi 0, %s21
      %p18 = scmp.ge.s32.totalorder %s17, 4
      %s24 = sphi 0, %s36
      %s25 = sphi 0, %s32
      %s26 = sphi 0, %s24
      %s27 = sphi 0, %s25
      %s28 = sphi 0, %s26
      %s29 = sphi 0, %s27
      %s41 = sphi 0, %s43
      %s44 = sphi 0, %s41
      %s45 = sphi 0, %s44
      %s61 = sphi 0, %s45
      %s67 = sphi 0, %s69
      %s70 = sphi 0, %s67
      %s71 = sphi 0, %s70
      %s87 = sphi 0, %s71
      %s93 = sphi 0, %s95
      %s96 = sphi 0, %s93
      %s97 = sphi 0, %s96
      %s113 = sphi 0, %s97
      %s117 = sphi 0, %s117
      %s119 = sphi 0, %s117
      %s120 = sphi 0, %s119
      %s134 = sphi 0, %s120
      %s138 = sphi 0, %s138
      %s140 = sphi 0, %s138
      %s141 = sphi 0, %s140
      %s155 = sphi 0, %s141
      %s163 = sphi 0, %s165
      %s166 = sphi 0, %s163
      %s167 = sphi 0, %s166
      %s183 = sphi 0, %s167
    $region4: #{tpu_custom_call.1} parent=1 // loop_header_branch
      %20 = sbr.rel (%p18) target = $region8
    $region5: #{tpu_custom_call.1} parent=1 // loop_body
      %s22 = ssub.s32 %s17, 1
      %s23 = ssub.s32 %s17, 2
      %s30 = sadd.s32 1, %s25
      %p31 = scmp.ge.s32.totalorder %s30, 2
      %s32 = scalar_select %p31, 0, %s30
      %s33 = sadd.s32 1, %s24
      %s34 = scalar_select %p31, %s33, %s24
      %p35 = scmp.ge.s32.totalorder %s34, 1
      %s36 = scalar_select %p35, 0, %s34
      %s37 = ssub.s32 %s25, %s32
      %s38 = ssub.s32 %s24, %s36
      %s39 = sor.u32 %s37, %s38
      %p40 = scmp.eq.s32.totalorder %s39, 0
      %s42 = sadd.s32 %s41, 1
      %s43 = scalar_select %p40, %s41, %s42
      %p46 = pneg %p40
      %p47 = scmp.eq.s32.totalorder %s17, 1
      %p48 = por %p46, %p47
      %p49 = scmp.ne.s32.totalorder %s41, %s44
      %p50 = scmp.eq.s32.totalorder %s17, 0
      %p51 = por %p49, %p50
      %p52 = scmp.ne.s32.totalorder %s41, %s44
      %p53 = scmp.eq.s32.totalorder %s22, 1
      %p54 = por %p52, %p53
      %p55 = scmp.ne.s32.totalorder %s44, %s45
      %p56 = scmp.eq.s32.totalorder %s22, 0
      %p57 = por %p55, %p56
      %p58 = scmp.ne.s32.totalorder %s44, %s45
      %p59 = scmp.eq.s32.totalorder %s23, 1
      %p60 = por %p58, %p59
      %p62 = scmp.ne.s32.totalorder %s45, %s61
      %p63 = scmp.eq.s32.totalorder %s23, 0
      %p64 = por %p62, %p63
      %s65 = ssub.s32 %s24, %s36
      %p66 = scmp.eq.s32.totalorder %s65, 0
      %s68 = sadd.s32 %s67, 1
      %s69 = scalar_select %p66, %s67, %s68
      %p72 = pneg %p66
      %p73 = scmp.eq.s32.totalorder %s17, 1
      %p74 = por %p72, %p73
      %p75 = scmp.ne.s32.totalorder %s67, %s70
      %p76 = scmp.eq.s32.totalorder %s17, 0
      %p77 = por %p75, %p76
      %p78 = scmp.ne.s32.totalorder %s67, %s70
      %p79 = scmp.eq.s32.totalorder %s22, 1
      %p80 = por %p78, %p79
      %p81 = scmp.ne.s32.totalorder %s70, %s71
      %p82 = scmp.eq.s32.totalorder %s22, 0
      %p83 = por %p81, %p82
      %p84 = scmp.ne.s32.totalorder %s70, %s71
      %p85 = scmp.eq.s32.totalorder %s23, 1
      %p86 = por %p84, %p85
      %p88 = scmp.ne.s32.totalorder %s71, %s87
      %p89 = scmp.eq.s32.totalorder %s23, 0
      %p90 = por %p88, %p89
      %s91 = ssub.s32 %s24, %s36
      %p92 = scmp.eq.s32.totalorder %s91, 0
      %s94 = sadd.s32 %s93, 1
      %s95 = scalar_select %p92, %s93, %s94
      %p98 = pneg %p92
      %p99 = scmp.eq.s32.totalorder %s17, 1
      %p100 = por %p98, %p99
      %p101 = scmp.ne.s32.totalorder %s93, %s96
      %p102 = scmp.eq.s32.totalorder %s17, 0
      %p103 = por %p101, %p102
      %p104 = scmp.ne.s32.totalorder %s93, %s96
      %p105 = scmp.eq.s32.totalorder %s22, 1
      %p106 = por %p104, %p105
      %p107 = scmp.ne.s32.totalorder %s96, %s97
      %p108 = scmp.eq.s32.totalorder %s22, 0
      %p109 = por %p107, %p108
      %p110 = scmp.ne.s32.totalorder %s96, %s97
      %p111 = scmp.eq.s32.totalorder %s23, 1
      %p112 = por %p110, %p111
      %p114 = scmp.ne.s32.totalorder %s97, %s113
      %p115 = scmp.eq.s32.totalorder %s23, 0
      %p116 = por %p114, %p115
      %s118 = sadd.s32 %s117, 1
      %p121 = scmp.eq.s32.totalorder %s17, 1
      %p122 = scmp.ne.s32.totalorder %s117, %s119
      %p123 = scmp.eq.s32.totalorder %s17, 0
      %p124 = por %p122, %p123
      %p125 = scmp.ne.s32.totalorder %s117, %s119
      %p126 = scmp.eq.s32.totalorder %s22, 1
      %p127 = por %p125, %p126
      %p128 = scmp.ne.s32.totalorder %s119, %s120
      %p129 = scmp.eq.s32.totalorder %s22, 0
      %p130 = por %p128, %p129
      %p131 = scmp.ne.s32.totalorder %s119, %s120
      %p132 = scmp.eq.s32.totalorder %s23, 1
      %p133 = por %p131, %p132
      %p135 = scmp.ne.s32.totalorder %s120, %s134
      %p136 = scmp.eq.s32.totalorder %s23, 0
      %p137 = por %p135, %p136
      %s139 = sadd.s32 %s138, 1
      %p142 = scmp.eq.s32.totalorder %s17, 1
      %p143 = scmp.ne.s32.totalorder %s138, %s140
      %p144 = scmp.eq.s32.totalorder %s17, 0
      %p145 = por %p143, %p144
      %p146 = scmp.ne.s32.totalorder %s138, %s140
      %p147 = scmp.eq.s32.totalorder %s22, 1
      %p148 = por %p146, %p147
      %p149 = scmp.ne.s32.totalorder %s140, %s141
      %p150 = scmp.eq.s32.totalorder %s22, 0
      %p151 = por %p149, %p150
      %p152 = scmp.ne.s32.totalorder %s140, %s141
      %p153 = scmp.eq.s32.totalorder %s23, 1
      %p154 = por %p152, %p153
      %p156 = scmp.ne.s32.totalorder %s141, %s155
      %p157 = scmp.eq.s32.totalorder %s23, 0
      %p158 = por %p156, %p157
      %s159 = ssub.s32 %s25, %s32
      %s160 = ssub.s32 %s24, %s36
      %s161 = sor.u32 %s159, %s160
      %p162 = scmp.eq.s32.totalorder %s161, 0
      %s164 = sadd.s32 %s163, 1
      %s165 = scalar_select %p162, %s163, %s164
      %p168 = pneg %p162
      %p169 = scmp.eq.s32.totalorder %s17, 1
      %p170 = por %p168, %p169
      %p171 = scmp.ne.s32.totalorder %s163, %s166
      %p172 = scmp.eq.s32.totalorder %s17, 0
      %p173 = por %p171, %p172
      %p174 = scmp.ne.s32.totalorder %s163, %s166
      %p175 = scmp.eq.s32.totalorder %s22, 1
      %p176 = por %p174, %p175
      %p177 = scmp.ne.s32.totalorder %s166, %s167
      %p178 = scmp.eq.s32.totalorder %s22, 0
      %p179 = por %p177, %p178
      %p180 = scmp.ne.s32.totalorder %s166, %s167
      %p181 = scmp.eq.s32.totalorder %s23, 1
      %p182 = por %p180, %p181
      %p184 = scmp.ne.s32.totalorder %s167, %s183
      %p185 = scmp.eq.s32.totalorder %s23, 0
      %p186 = por %p184, %p185
      %p187 = scmp.le.s32.totalorder 1, %s17
      %p188 = scmp.lt.s32.totalorder %s17, 3
      %p189 = pnand %p187, %p188
      %p190 = pneg %p189
      // Predicated region
      $region9: #{tpu_custom_call.1} parent=5 // pred_check
        _
      $region10: #{tpu_custom_call.1} parent=5 // pred_check_branch
        %192 = sbr.rel (%p189) target = $region12
      $region11: #{tpu_custom_call.1} parent=5 // pred_region
        %s193 = ssub.s32 %s17, 1
        // Predicated region
        $region13: #{tpu_custom_call.1} parent=11 // pred_check
          %p194 = pneg %p83
        $region14: #{tpu_custom_call.1} parent=11 // pred_check_branch
          %196 = sbr.rel (%p194) target = $region16
        $region15: #{tpu_custom_call.1} parent=11 // pred_region
          %s197 = smul.u32 2, %s26
          %p198 = scmp.lt.s32.totalorder %s197, 1
          %s199 = scalar_select %p198, %s197, 1
          %s200 = scalar_lea.vmem %s1, %s199
          %s201 = smul.u32 2, %s26
        $region16: #{tpu_custom_call.1} parent=11 // pred_fallthru
          _
        // Predicated region
        $region17: #{tpu_custom_call.1} parent=11 // pred_check
          %p202 = pneg %p109
        $region18: #{tpu_custom_call.1} parent=11 // pred_check_branch
          %204 = sbr.rel (%p202) target = $region20
        $region19: #{tpu_custom_call.1} parent=11 // pred_region
          %s205 = smul.u32 2, %s26
          %p206 = scmp.lt.s32.totalorder %s205, 1
          %s207 = scalar_select %p206, %s205, 1
          %s208 = scalar_lea.vmem %s2, %s207
          %s209 = smul.u32 2, %s26
        $region20: #{tpu_custom_call.1} parent=11 // pred_fallthru
          _
        // Predicated region
        $region21: #{tpu_custom_call.1} parent=11 // pred_check
          %p210 = pneg %p130
        $region22: #{tpu_custom_call.1} parent=11 // pred_check_branch
          %212 = sbr.rel (%p210) target = $region24
        $region23: #{tpu_custom_call.1} parent=11 // pred_region
          _
        $region24: #{tpu_custom_call.1} parent=11 // pred_fallthru
          _
        // Predicated region
        $region25: #{tpu_custom_call.1} parent=11 // pred_check
          %p213 = pneg %p151
        $region26: #{tpu_custom_call.1} parent=11 // pred_check_branch
          %215 = sbr.rel (%p213) target = $region28
        $region27: #{tpu_custom_call.1} parent=11 // pred_region
          _
        $region28: #{tpu_custom_call.1} parent=11 // pred_fallthru
          _
      $region12: #{tpu_custom_call.1} parent=5 // pred_fallthru
        _
      %p216 = scmp.lt.s32.totalorder %s17, 2
      // Predicated region
      $region29: #{tpu_custom_call.1} parent=5 // pred_check
        %p217 = pneg %p216
      $region30: #{tpu_custom_call.1} parent=5 // pred_check_branch
        %219 = sbr.rel (%p217) target = $region32
      $region31: #{tpu_custom_call.1} parent=5 // pred_region
        // Predicated region
        $region33: #{tpu_custom_call.1} parent=31 // pred_check
          %p220 = pneg %p51
        $region34: #{tpu_custom_call.1} parent=31 // pred_check_branch
          %222 = sbr.rel (%p220) target = $region36
        $region35: #{tpu_custom_call.1} parent=31 // pred_region
          %s223 = sand.u32 %s41, 1
          %s224 = scalar_lea.sflag [#allocation4], %s223
          %s225 = sand.u32 %s41, 1
          %s226 = smul.addr %s225, 8
          %s227 = scalar_lea.vmem [#allocation3], %s226
          %s228 = smul.u32 2, %s24
          %s230 = ssub.s32 128, 128
          %231 = vsyncadd %s224, %s230
          %s232 = smul.addr %s25, 2
          %s233 = sadd.s32 %s228, %s232
          %s234 = smul.addr %s233, 64
          %s235 = scalar_lea.hbm %s0, %s234
          %s237 = sshll.u32 %s227, 4
          %s238 = int_to_ptr.vmem [resolvable:$true] %s237
          %240 = dma.hbm_to_vmem [thread:$0]  %s235, 128, %s238, %s224
        $region36: #{tpu_custom_call.1} parent=31 // pred_fallthru
          _
      $region32: #{tpu_custom_call.1} parent=5 // pred_fallthru
        _
      %p241 = scmp.le.s32.totalorder 1, %s17
      %p242 = scmp.lt.s32.totalorder %s17, 3
      %p243 = pnand %p241, %p242
      %p244 = pneg %p243
      // Predicated region
      $region37: #{tpu_custom_call.1} parent=5 // pred_check
        _
      $region38: #{tpu_custom_call.1} parent=5 // pred_check_branch
        %246 = sbr.rel (%p243) target = $region40
      $region39: #{tpu_custom_call.1} parent=5 // pred_region
        %s247 = ssub.s32 %s17, 1
        %s248 = sand.u32 %s44, 1
        %s249 = scalar_lea.sflag [#allocation4], %s248
        %s250 = sand.u32 %s44, 1
        %s251 = smul.addr %s250, 8
        %s252 = scalar_lea.vmem [#allocation3], %s251
        // Predicated region
        $region41: #{tpu_custom_call.1} parent=39 // pred_check
          %p253 = pneg %p57
        $region42: #{tpu_custom_call.1} parent=39 // pred_check_branch
          %255 = sbr.rel (%p253) target = $region44
        $region43: #{tpu_custom_call.1} parent=39 // pred_region
          %256 = dma.done %s249, 128
        $region44: #{tpu_custom_call.1} parent=39 // pred_fallthru
          _
        %s257 = sand.u32 %s44, 1
        %s258 = scalar_lea.sflag [#allocation4], %s257
        %s259 = sand.u32 %s44, 1
        %s260 = smul.addr %s259, 8
        %s261 = scalar_lea.vmem [#allocation3], %s260
        %p262 = pneg %p57
        %p263 = pneg %p54
        %s264 = smul.u32 2, %s26
        %p265 = scmp.lt.s32.totalorder %s264, 1
        %s266 = scalar_select %p265, %s264, 1
        %s267 = scalar_lea.vmem %s1, %s266
        %p268 = pneg %p83
        %p269 = pneg %p80
        %s270 = smul.u32 2, %s26
        %p271 = scmp.lt.s32.totalorder %s270, 1
        %s272 = scalar_select %p271, %s270, 1
        %s273 = scalar_lea.vmem %s2, %s272
        %p274 = pneg %p109
        %p275 = pneg %p106
        %p276 = pneg %p130
        %p277 = pneg %p127
        %p278 = pneg %p151
        %p279 = pneg %p148
        %p280 = pneg %p179
        %p281 = pneg %p176
        %s282 = sand.u32 %s166, 1
        %s283 = scalar_lea.sflag [#allocation5], %s282
        %s284 = sand.u32 %s166, 1
        %s285 = smul.addr %s284, 8
        %s286 = scalar_lea.vmem [#allocation6], %s285
        %s287 = smul.u32 2, %s26
        %s288 = smul.u32 2, %s26
        %p289 = scmp.lt.s32.totalorder %s288, 1
        %s290 = scalar_select %p289, %s288, 1
        %s291 = scalar_lea.vmem %s1, %s290
        %s292 = smul.u32 2, %s26
        %s293 = smul.u32 2, %s26
        %p294 = scmp.lt.s32.totalorder %s293, 1
        %s295 = scalar_select %p294, %s293, 1
        %s296 = scalar_lea.vmem %s2, %s295
        %s297 = smul.u32 2, %s26
        %s298 = smul.u32 2, %s26
        %p299 = scmp.eq.s32.totalorder %s27, 0
        // Predicated region
        $region45: #{tpu_custom_call.1} parent=39 // pred_check
          %p300 = pneg %p299
        $region46: #{tpu_custom_call.1} parent=39 // pred_check_branch
          %302 = sbr.rel (%p300) target = $region48
        $region47: #{tpu_custom_call.1} parent=39 // pred_region
          %v303 = vld [vmem:[%s291] sm:$0x3]
          %v304 = vld [vmem:[%s3] sm:$0x3]
          %v306 = vlaneseq
          %v307 = vshrl.u32 %v306, 7
          %v308 = vsub.s32 0, %v307
          %v309 = vrot.slane %v303, %v308
          %v310 = vlaneseq
          %v311 = vshrl.u32 %v310, 7
          %v312 = vsub.s32 1, %v311
          %v313 = vrot.slane %v303, %v312
          %317 = vset.pattern.permute.xlu0 0
          %318 = vperm.xlu0 %317, %v304
          %v319 = vpop.permute.xlu0 %318
          %v321 = vmul.f32 %v309, %v319
          %v322 = vmul.f32 %v313, %v319
          %v323 = vld [vmem:[%s4] sm:$0x3]
          %325 = vset.pattern.permute.xlu0 0
          %326 = vperm.xlu0 %325, %v323
          %v327 = vpop.permute.xlu0 %326
          %v329 = vadd.f32 %v321, %v327
          %v330 = vadd.f32 %v322, %v327
          %v331 = vld [vmem:[%s296] sm:$0x3]
          %v333 = vlaneseq
          %v334 = vshrl.u32 %v333, 7
          %v335 = vsub.s32 0, %v334
          %v336 = vrot.slane %v331, %v335
          %v337 = vlaneseq
          %v338 = vshrl.u32 %v337, 7
          %v339 = vsub.s32 1, %v338
          %v340 = vrot.slane %v331, %v339
          %v343 = vmul.f32 %v336, %v319
          %v344 = vmul.f32 %v340, %v319
          %v345 = vadd.f32 %v343, %v327
          %v346 = vadd.f32 %v344, %v327
          %v347 = vand.u32 2147483647, %v329
          %vm348 = vcmp.le.f32.partialorder %v347, 0.7853982
          %vm349 = vcmp.lt.s32.totalorder %v329, 0
          %v350 = vand.u32 %v329, 2139095040
          %v351 = vshrl.u32 %v350, 23
          %v352 = vsub.s32 %v351, 127
          %v353 = vand.u32 2147483647, %v329
          %v354 = vand.u32 %v353, 8388607
          %v355 = vor.u32 %v354, 8388608
          %v356 = vsub.s32 0, %v355
          %v357 = vadd.s32 %v352, 1
          %vm358 = vcmp.gt.s32.totalorder %v357, 0
          %v359 = vsel %vm358, %v357, 0
          %v360 = vshrl.u32 %v359, 5
          %v361 = vand.u32 %v359, 31
          %v362 = vsub.s32 32, %v361
          %v363 = vshrl.u32 683565275, %v362
          %v364 = vshll.u32 683565275, %v361
          %v365 = vshrl.u32 2475754826, %v362
          %v366 = vor.u32 %v364, %v365
          %v367 = vshll.u32 2475754826, %v361
          %v368 = vshrl.u32 2131351028, %v362
          %v369 = vor.u32 %v367, %v368
          %v370 = vshll.u32 2131351028, %v361
          %v371 = vshrl.u32 2102212464, %v362
          %v372 = vor.u32 %v370, %v371
          %v373 = vshll.u32 2102212464, %v361
          %v374 = vshrl.u32 920167782, %v362
          %v375 = vor.u32 %v373, %v374
          %v376 = vshll.u32 920167782, %v361
          %v377 = vshrl.u32 1326507024, %v362
          %v378 = vor.u32 %v376, %v377
          %vm379 = vcmp.lt.s32.totalorder %v360, 1
          %vm380 = vcmp.lt.s32.totalorder %v360, 2
          %vm381 = vcmp.lt.s32.totalorder %v360, 3
          %vm382 = vcmp.lt.s32.totalorder %v360, 4
          %v383 = vsel %vm379, %v363, %v366
          %v384 = vsel %vm382, %v372, 2102212464
          %v385 = vsel %vm381, %v369, %v384
          %v386 = vsel %vm380, %v383, %v385
          %v387 = vsel %vm379, %v366, %v369
          %v388 = vsel %vm382, %v375, 920167782
          %v389 = vsel %vm381, %v372, %v388
          %v390 = vsel %vm380, %v387, %v389
          %v391 = vsel %vm379, %v369, %v372
          %v392 = vsel %vm382, %v378, 1326507024
          %v393 = vsel %vm381, %v375, %v392
          %v394 = vsel %vm380, %v391, %v393
          %v395 = vshll.u32 %v355, 8
          %v396 = vmul.u32.u64.compose %v395, %v394
          %v397 = vextract.low.u32 %v396
          %v398 = vextract.high.u32 %v396
          %v399 = vmul.u32.u64.compose %v395, %v390
          %v400 = vextract.low.u32 %v399
          %v401 = vextract.high.u32 %v399
          %v402 = vmul.u32 %v395, %v386
          %v403 = vadd.s32 %v398, %v400
          %vm404 = vc.u32 %v398, %v400
          %v405 = vadd.s32 %v401, 1
          %v406 = vsel %vm404, %v405, %v401
          %v407 = vadd.s32 %v402, %v406
          %v408 = vadd.s32 %v407, 536870912
          %v409 = vshrl.u32 %v408, 30
          %v410 = vshll.u32 %v409, 30
          %v411 = vsub.s32 %v407, %v410
          %vm412 = vcmp.lt.s32.totalorder %v411, 0
          %v413 = vsub.s32 0, %v411
          %v414 = vsel %vm412, %v413, %v411
          %v415 = vclz %v414
          %v416 = vsub.s32 %v415, 2
          %vm417 = vcmp.gt.s32.totalorder 0, %v416
          %v418 = vsel %vm417, 0, %v416
          %v419 = vsub.s32 32, %v418
          %v420 = vshll.u32 %v411, %v418
          %v421 = vshrl.u32 %v403, %v419
          %v422 = vor.u32 %v420, %v421
          %v423 = vsub.s32 4294967266, %v418
          %v424 = vadd.s32 %v423, 127
          %v425 = vshll.u32 %v424, 23
          %v426 = vor.u32 4788187, %v425
          %v427 = vand.u32 2147483647, %v426
          %v429 = vcvt.s32.f32 %v422
          %v430 = vmul.f32 %v429, %v427
          %v431 = vxor.u32 %v430, 2147483648
          %v432 = vsel %vm349, %v431, %v430
          %v433 = vsub.s32 4, %v409
          %v434 = vsel %vm349, %v433, %v409
          %v435 = vsel %vm348, %v329, %v432
          %v436 = vsel %vm348, 0, %v434
          %v437 = vcosq.f32.pop %v435
          %v438 = vsinq.f32.pop %v435
          %vm439 = vweird.f32 %v329
          %v440 = vadd.s32 %v436, 3
          %v441 = vand.u32 %v440, 3
          %vm442 = vcmp.lt.s32.totalorder %v441, 2
          %vm443 = vcmp.eq.s32.totalorder %v441, 0
          %v444 = vxor.u32 %v438, 2147483648
          %v445 = vsel %vm443, %v437, %v444
          %vm446 = vcmp.eq.s32.totalorder %v441, 2
          %v447 = vxor.u32 %v437, 2147483648
          %v448 = vsel %vm446, %v447, %v438
          %v449 = vsel %vm442, %v445, %v448
          %v450 = vsel %vm439, nan, %v449
          %v451 = vand.u32 2147483647, %v330
          %vm452 = vcmp.le.f32.partialorder %v451, 0.7853982
          %vm453 = vcmp.lt.s32.totalorder %v330, 0
          %v454 = vand.u32 %v330, 2139095040
          %v455 = vshrl.u32 %v454, 23
          %v456 = vsub.s32 %v455, 127
          %v457 = vand.u32 2147483647, %v330
          %v458 = vand.u32 %v457, 8388607
          %v459 = vor.u32 %v458, 8388608
          %v460 = vsub.s32 0, %v459
          %v461 = vadd.s32 %v456, 1
          %vm462 = vcmp.gt.s32.totalorder %v461, 0
          %v463 = vsel %vm462, %v461, 0
          %v464 = vshrl.u32 %v463, 5
          %v465 = vand.u32 %v463, 31
          %v466 = vsub.s32 32, %v465
          %v467 = vshrl.u32 683565275, %v466
          %v468 = vshll.u32 683565275, %v465
          %v469 = vshrl.u32 2475754826, %v466
          %v470 = vor.u32 %v468, %v469
          %v471 = vshll.u32 2475754826, %v465
          %v472 = vshrl.u32 2131351028, %v466
          %v473 = vor.u32 %v471, %v472
          %v474 = vshll.u32 2131351028, %v465
          %v475 = vshrl.u32 2102212464, %v466
          %v476 = vor.u32 %v474, %v475
          %v477 = vshll.u32 2102212464, %v465
          %v478 = vshrl.u32 920167782, %v466
          %v479 = vor.u32 %v477, %v478
          %v480 = vshll.u32 920167782, %v465
          %v481 = vshrl.u32 1326507024, %v466
          %v482 = vor.u32 %v480, %v481
          %vm483 = vcmp.lt.s32.totalorder %v464, 1
          %vm484 = vcmp.lt.s32.totalorder %v464, 2
          %vm485 = vcmp.lt.s32.totalorder %v464, 3
          %vm486 = vcmp.lt.s32.totalorder %v464, 4
          %v487 = vsel %vm483, %v467, %v470
          %v488 = vsel %vm486, %v476, 2102212464
          %v489 = vsel %vm485, %v473, %v488
          %v490 = vsel %vm484, %v487, %v489
          %v491 = vsel %vm483, %v470, %v473
          %v492 = vsel %vm486, %v479, 920167782
          %v493 = vsel %vm485, %v476, %v492
          %v494 = vsel %vm484, %v491, %v493
          %v495 = vsel %vm483, %v473, %v476
          %v496 = vsel %vm486, %v482, 1326507024
          %v497 = vsel %vm485, %v479, %v496
          %v498 = vsel %vm484, %v495, %v497
          %v499 = vshll.u32 %v459, 8
          %v500 = vmul.u32.u64.compose %v499, %v498
          %v501 = vextract.low.u32 %v500
          %v502 = vextract.high.u32 %v500
          %v503 = vmul.u32.u64.compose %v499, %v494
          %v504 = vextract.low.u32 %v503
          %v505 = vextract.high.u32 %v503
          %v506 = vmul.u32 %v499, %v490
          %v507 = vadd.s32 %v502, %v504
          %vm508 = vc.u32 %v502, %v504
          %v509 = vadd.s32 %v505, 1
          %v510 = vsel %vm508, %v509, %v505
          %v511 = vadd.s32 %v506, %v510
          %v512 = vadd.s32 %v511, 536870912
          %v513 = vshrl.u32 %v512, 30
          %v514 = vshll.u32 %v513, 30
          %v515 = vsub.s32 %v511, %v514
          %vm516 = vcmp.lt.s32.totalorder %v515, 0
          %v517 = vsub.s32 0, %v515
          %v518 = vsel %vm516, %v517, %v515
          %v519 = vclz %v518
          %v520 = vsub.s32 %v519, 2
          %vm521 = vcmp.gt.s32.totalorder 0, %v520
          %v522 = vsel %vm521, 0, %v520
          %v523 = vsub.s32 32, %v522
          %v524 = vshll.u32 %v515, %v522
          %v525 = vshrl.u32 %v507, %v523
          %v526 = vor.u32 %v524, %v525
          %v527 = vsub.s32 4294967266, %v522
          %v528 = vadd.s32 %v527, 127
          %v529 = vshll.u32 %v528, 23
          %v530 = vor.u32 4788187, %v529
          %v531 = vand.u32 2147483647, %v530
          %v533 = vcvt.s32.f32 %v526
          %v534 = vmul.f32 %v533, %v531
          %v535 = vxor.u32 %v534, 2147483648
          %v536 = vsel %vm453, %v535, %v534
          %v537 = vsub.s32 4, %v513
          %v538 = vsel %vm453, %v537, %v513
          %v539 = vsel %vm452, %v330, %v536
          %v540 = vsel %vm452, 0, %v538
          %v541 = vcosq.f32.pop %v539
          %v542 = vsinq.f32.pop %v539
          %vm543 = vweird.f32 %v330
          %v544 = vadd.s32 %v540, 3
          %v545 = vand.u32 %v544, 3
          %vm546 = vcmp.lt.s32.totalorder %v545, 2
          %vm547 = vcmp.eq.s32.totalorder %v545, 0
          %v548 = vxor.u32 %v542, 2147483648
          %v549 = vsel %vm547, %v541, %v548
          %vm550 = vcmp.eq.s32.totalorder %v545, 2
          %v551 = vxor.u32 %v541, 2147483648
          %v552 = vsel %vm550, %v551, %v542
          %v553 = vsel %vm546, %v549, %v552
          %v554 = vsel %vm543, nan, %v553
          %v557 = vcombine.low %v450, %v554
          %559 = vst [vmem:[#allocation2] sm:$0x33] %v557
          %v560 = vand.u32 2147483647, %v345
          %vm561 = vcmp.le.f32.partialorder %v560, 0.7853982
          %vm562 = vcmp.lt.s32.totalorder %v345, 0
          %v563 = vand.u32 %v345, 2139095040
          %v564 = vshrl.u32 %v563, 23
          %v565 = vsub.s32 %v564, 127
          %v566 = vand.u32 2147483647, %v345
          %v567 = vand.u32 %v566, 8388607
          %v568 = vor.u32 %v567, 8388608
          %v569 = vsub.s32 0, %v568
          %v570 = vadd.s32 %v565, 1
          %vm571 = vcmp.gt.s32.totalorder %v570, 0
          %v572 = vsel %vm571, %v570, 0
          %v573 = vshrl.u32 %v572, 5
          %v574 = vand.u32 %v572, 31
          %v575 = vsub.s32 32, %v574
          %v576 = vshrl.u32 683565275, %v575
          %v577 = vshll.u32 683565275, %v574
          %v578 = vshrl.u32 2475754826, %v575
          %v579 = vor.u32 %v577, %v578
          %v580 = vshll.u32 2475754826, %v574
          %v581 = vshrl.u32 2131351028, %v575
          %v582 = vor.u32 %v580, %v581
          %v583 = vshll.u32 2131351028, %v574
          %v584 = vshrl.u32 2102212464, %v575
          %v585 = vor.u32 %v583, %v584
          %v586 = vshll.u32 2102212464, %v574
          %v587 = vshrl.u32 920167782, %v575
          %v588 = vor.u32 %v586, %v587
          %v589 = vshll.u32 920167782, %v574
          %v590 = vshrl.u32 1326507024, %v575
          %v591 = vor.u32 %v589, %v590
          %vm592 = vcmp.lt.s32.totalorder %v573, 1
          %vm593 = vcmp.lt.s32.totalorder %v573, 2
          %vm594 = vcmp.lt.s32.totalorder %v573, 3
          %vm595 = vcmp.lt.s32.totalorder %v573, 4
          %v596 = vsel %vm592, %v576, %v579
          %v597 = vsel %vm595, %v585, 2102212464
          %v598 = vsel %vm594, %v582, %v597
          %v599 = vsel %vm593, %v596, %v598
          %v600 = vsel %vm592, %v579, %v582
          %v601 = vsel %vm595, %v588, 920167782
          %v602 = vsel %vm594, %v585, %v601
          %v603 = vsel %vm593, %v600, %v602
          %v604 = vsel %vm592, %v582, %v585
          %v605 = vsel %vm595, %v591, 1326507024
          %v606 = vsel %vm594, %v588, %v605
          %v607 = vsel %vm593, %v604, %v606
          %v608 = vshll.u32 %v568, 8
          %v609 = vmul.u32.u64.compose %v608, %v607
          %v610 = vextract.low.u32 %v609
          %v611 = vextract.high.u32 %v609
          %v612 = vmul.u32.u64.compose %v608, %v603
          %v613 = vextract.low.u32 %v612
          %v614 = vextract.high.u32 %v612
          %v615 = vmul.u32 %v608, %v599
          %v616 = vadd.s32 %v611, %v613
          %vm617 = vc.u32 %v611, %v613
          %v618 = vadd.s32 %v614, 1
          %v619 = vsel %vm617, %v618, %v614
          %v620 = vadd.s32 %v615, %v619
          %v621 = vadd.s32 %v620, 536870912
          %v622 = vshrl.u32 %v621, 30
          %v623 = vshll.u32 %v622, 30
          %v624 = vsub.s32 %v620, %v623
          %vm625 = vcmp.lt.s32.totalorder %v624, 0
          %v626 = vsub.s32 0, %v624
          %v627 = vsel %vm625, %v626, %v624
          %v628 = vclz %v627
          %v629 = vsub.s32 %v628, 2
          %vm630 = vcmp.gt.s32.totalorder 0, %v629
          %v631 = vsel %vm630, 0, %v629
          %v632 = vsub.s32 32, %v631
          %v633 = vshll.u32 %v624, %v631
          %v634 = vshrl.u32 %v616, %v632
          %v635 = vor.u32 %v633, %v634
          %v636 = vsub.s32 4294967266, %v631
          %v637 = vadd.s32 %v636, 127
          %v638 = vshll.u32 %v637, 23
          %v639 = vor.u32 4788187, %v638
          %v640 = vand.u32 2147483647, %v639
          %v642 = vcvt.s32.f32 %v635
          %v643 = vmul.f32 %v642, %v640
          %v644 = vxor.u32 %v643, 2147483648
          %v645 = vsel %vm562, %v644, %v643
          %v646 = vsub.s32 4, %v622
          %v647 = vsel %vm562, %v646, %v622
          %v648 = vsel %vm561, %v345, %v645
          %v649 = vsel %vm561, 0, %v647
          %v650 = vcosq.f32.pop %v648
          %v651 = vsinq.f32.pop %v648
          %vm652 = vweird.f32 %v345
          %v653 = vadd.s32 %v649, 3
          %v654 = vand.u32 %v653, 3
          %vm655 = vcmp.lt.s32.totalorder %v654, 2
          %vm656 = vcmp.eq.s32.totalorder %v654, 0
          %v657 = vxor.u32 %v651, 2147483648
          %v658 = vsel %vm656, %v650, %v657
          %vm659 = vcmp.eq.s32.totalorder %v654, 2
          %v660 = vxor.u32 %v650, 2147483648
          %v661 = vsel %vm659, %v660, %v651
          %v662 = vsel %vm655, %v658, %v661
          %v663 = vsel %vm652, nan, %v662
          %v664 = vand.u32 2147483647, %v346
          %vm665 = vcmp.le.f32.partialorder %v664, 0.7853982
          %vm666 = vcmp.lt.s32.totalorder %v346, 0
          %v667 = vand.u32 %v346, 2139095040
          %v668 = vshrl.u32 %v667, 23
          %v669 = vsub.s32 %v668, 127
          %v670 = vand.u32 2147483647, %v346
          %v671 = vand.u32 %v670, 8388607
          %v672 = vor.u32 %v671, 8388608
          %v673 = vsub.s32 0, %v672
          %v674 = vadd.s32 %v669, 1
          %vm675 = vcmp.gt.s32.totalorder %v674, 0
          %v676 = vsel %vm675, %v674, 0
          %v677 = vshrl.u32 %v676, 5
          %v678 = vand.u32 %v676, 31
          %v679 = vsub.s32 32, %v678
          %v680 = vshrl.u32 683565275, %v679
          %v681 = vshll.u32 683565275, %v678
          %v682 = vshrl.u32 2475754826, %v679
          %v683 = vor.u32 %v681, %v682
          %v684 = vshll.u32 2475754826, %v678
          %v685 = vshrl.u32 2131351028, %v679
          %v686 = vor.u32 %v684, %v685
          %v687 = vshll.u32 2131351028, %v678
          %v688 = vshrl.u32 2102212464, %v679
          %v689 = vor.u32 %v687, %v688
          %v690 = vshll.u32 2102212464, %v678
          %v691 = vshrl.u32 920167782, %v679
          %v692 = vor.u32 %v690, %v691
          %v693 = vshll.u32 920167782, %v678
          %v694 = vshrl.u32 1326507024, %v679
          %v695 = vor.u32 %v693, %v694
          %vm696 = vcmp.lt.s32.totalorder %v677, 1
          %vm697 = vcmp.lt.s32.totalorder %v677, 2
          %vm698 = vcmp.lt.s32.totalorder %v677, 3
          %vm699 = vcmp.lt.s32.totalorder %v677, 4
          %v700 = vsel %vm696, %v680, %v683
          %v701 = vsel %vm699, %v689, 2102212464
          %v702 = vsel %vm698, %v686, %v701
          %v703 = vsel %vm697, %v700, %v702
          %v704 = vsel %vm696, %v683, %v686
          %v705 = vsel %vm699, %v692, 920167782
          %v706 = vsel %vm698, %v689, %v705
          %v707 = vsel %vm697, %v704, %v706
          %v708 = vsel %vm696, %v686, %v689
          %v709 = vsel %vm699, %v695, 1326507024
          %v710 = vsel %vm698, %v692, %v709
          %v711 = vsel %vm697, %v708, %v710
          %v712 = vshll.u32 %v672, 8
          %v713 = vmul.u32.u64.compose %v712, %v711
          %v714 = vextract.low.u32 %v713
          %v715 = vextract.high.u32 %v713
          %v716 = vmul.u32.u64.compose %v712, %v707
          %v717 = vextract.low.u32 %v716
          %v718 = vextract.high.u32 %v716
          %v719 = vmul.u32 %v712, %v703
          %v720 = vadd.s32 %v715, %v717
          %vm721 = vc.u32 %v715, %v717
          %v722 = vadd.s32 %v718, 1
          %v723 = vsel %vm721, %v722, %v718
          %v724 = vadd.s32 %v719, %v723
          %v725 = vadd.s32 %v724, 536870912
          %v726 = vshrl.u32 %v725, 30
          %v727 = vshll.u32 %v726, 30
          %v728 = vsub.s32 %v724, %v727
          %vm729 = vcmp.lt.s32.totalorder %v728, 0
          %v730 = vsub.s32 0, %v728
          %v731 = vsel %vm729, %v730, %v728
          %v732 = vclz %v731
          %v733 = vsub.s32 %v732, 2
          %vm734 = vcmp.gt.s32.totalorder 0, %v733
          %v735 = vsel %vm734, 0, %v733
          %v736 = vsub.s32 32, %v735
          %v737 = vshll.u32 %v728, %v735
          %v738 = vshrl.u32 %v720, %v736
          %v739 = vor.u32 %v737, %v738
          %v740 = vsub.s32 4294967266, %v735
          %v741 = vadd.s32 %v740, 127
          %v742 = vshll.u32 %v741, 23
          %v743 = vor.u32 4788187, %v742
          %v744 = vand.u32 2147483647, %v743
          %v746 = vcvt.s32.f32 %v739
          %v747 = vmul.f32 %v746, %v744
          %v748 = vxor.u32 %v747, 2147483648
          %v749 = vsel %vm666, %v748, %v747
          %v750 = vsub.s32 4, %v726
          %v751 = vsel %vm666, %v750, %v726
          %v752 = vsel %vm665, %v346, %v749
          %v753 = vsel %vm665, 0, %v751
          %v754 = vcosq.f32.pop %v752
          %v755 = vsinq.f32.pop %v752
          %vm756 = vweird.f32 %v346
          %v757 = vadd.s32 %v753, 3
          %v758 = vand.u32 %v757, 3
          %vm759 = vcmp.lt.s32.totalorder %v758, 2
          %vm760 = vcmp.eq.s32.totalorder %v758, 0
          %v761 = vxor.u32 %v755, 2147483648
          %v762 = vsel %vm760, %v754, %v761
          %vm763 = vcmp.eq.s32.totalorder %v758, 2
          %v764 = vxor.u32 %v754, 2147483648
          %v765 = vsel %vm763, %v764, %v755
          %v766 = vsel %vm759, %v762, %v765
          %v767 = vsel %vm756, nan, %v766
          %v770 = vcombine.low %v663, %v767
          %v771 = vrot.slane %v770, 6
          %773 = vst [vmem:[#allocation2] sm:$0xcc] %v771
        $region48: #{tpu_custom_call.1} parent=39 // pred_fallthru
          _
        %v774 = vld [vmem:[#allocation2] sm:$0xff]
        %v775 = vld [vmem:[%s252] sm:$0xff]
        %v776 = vadd.f32 %v774, %v775
        %777 = vst [vmem:[%s286] sm:$0xff] %v776
        %s778 = sand.u32 %s166, 1
        %s779 = scalar_lea.sflag [#allocation5], %s778
        %s780 = sand.u32 %s166, 1
        %s781 = smul.addr %s780, 8
        %s782 = scalar_lea.vmem [#allocation6], %s781
        // Predicated region
        $region49: #{tpu_custom_call.1} parent=39 // pred_check
          %p783 = pneg %p176
        $region50: #{tpu_custom_call.1} parent=39 // pred_check_branch
          %785 = sbr.rel (%p783) target = $region52
        $region51: #{tpu_custom_call.1} parent=39 // pred_region
          %s786 = smul.u32 2, %s26
          %s788 = ssub.s32 128, 128
          %789 = vsyncadd %s779, %s788
          %s790 = smul.addr %s27, 2
          %s791 = sadd.s32 %s786, %s790
          %s792 = smul.addr %s791, 64
          %s793 = scalar_lea.hbm %s5, %s792
          %s795 = sshll.u32 %s782, 4
          %s796 = int_to_ptr.vmem [resolvable:$true] %s795
          %798 = dma.vmem_to_hbm [thread:$0]  %s796, 128, %s793, %s779
        $region52: #{tpu_custom_call.1} parent=39 // pred_fallthru
          _
      $region40: #{tpu_custom_call.1} parent=5 // pred_fallthru
        _
      %p799 = scmp.le.s32.totalorder 2, %s17
      // Predicated region
      $region53: #{tpu_custom_call.1} parent=5 // pred_check
        %p800 = pneg %p799
      $region54: #{tpu_custom_call.1} parent=5 // pred_check_branch
        %802 = sbr.rel (%p800) target = $region56
      $region55: #{tpu_custom_call.1} parent=5 // pred_region
        %s803 = ssub.s32 %s17, 2
        // Predicated region
        $region57: #{tpu_custom_call.1} parent=55 // pred_check
          %p804 = pneg %p182
        $region58: #{tpu_custom_call.1} parent=55 // pred_check_branch
          %806 = sbr.rel (%p804) target = $region60
        $region59: #{tpu_custom_call.1} parent=55 // pred_region
          %s807 = sand.u32 %s167, 1
          %s808 = scalar_lea.sflag [#allocation5], %s807
          %s809 = sand.u32 %s167, 1
          %s810 = smul.addr %s809, 8
          %s811 = scalar_lea.vmem [#allocation6], %s810
          %812 = dma.done %s808, 128
        $region60: #{tpu_custom_call.1} parent=55 // pred_fallthru
          _
      $region56: #{tpu_custom_call.1} parent=5 // pred_fallthru
        _
    $region6: #{tpu_custom_call.1} parent=1 // loop_footer
      %s21 = sadd.s32 1, %s17
    $region7: #{tpu_custom_call.1} parent=1 // loop_footer_branch
      %16 = sbr.rel target = $region3
    $region8: #{tpu_custom_call.1} parent=1 // loop_exit
      _
    %813 = vsyncpa [#allocation4], 1
    %s814 = scalar_lea.sflag [#allocation4], 1
    %815 = vsyncpa %s814, 1
    %816 = vsyncpa [#allocation5], 1
    %s817 = scalar_lea.sflag [#allocation5], 1
    %818 = vsyncpa %s817, 1

</llo_original>
